<compile_context>
chip_gen: v7x
topology: tpu7x:2x2x1
jax: 0.10.0
libtpu: 0.0.40
codegen_flags: <defaults>
</compile_context>

<pallas_src>
import functools

import jax
import jax.numpy as jnp
from jax.experimental import pallas as pl
from jax.experimental.pallas import tpu as pltpu


def _attention_kernel(inp_ref, src_ref, mask_ref, w_inp_cat_ref, w_out_ctx_t_ref,
                      out_ref, attn_ref, *, source_embed_dim):
    inp = inp_ref[...]                                 # (B, Din)      f32
    src = src_ref[...].astype(jnp.float32)             # (B, Dsrc, S)  storage f32/bf16
    mask_add = mask_ref[...]                           # (B, S)        0.0 keep / -1e30 pad

    # Fused input projections: one MXU matmul, sliced in-register.
    #   proj[:, :Dsrc]  = input_proj(input)
    #   proj[:, Dsrc:]  = output_proj's input-half contribution
    proj = jnp.dot(inp, w_inp_cat_ref[...], preferred_element_type=jnp.float32)
    x = proj[:, :source_embed_dim]                     # (B, Dsrc)
    inp_out = proj[:, source_embed_dim:]               # (B, Dout)

    # scores[b, s] = sum_d src[b, d, s] * x[b, d]  -> (B, S)
    # VPU broadcast-multiply (x over lanes) + sublane reduce over d (XLU); S stays lane-dense.
    scores = jnp.sum(src * x[:, :, None], axis=1) + mask_add

    # Softmax over S (lane axis), f32, exact normalization.
    m = jnp.max(scores, axis=-1, keepdims=True)
    e = jnp.exp(scores - m)
    denom = jnp.sum(e, axis=-1, keepdims=True)
    attn = e / denom
    attn_ref[...] = attn.astype(attn_ref.dtype)        # unmasked lane-dense (B, S) store

    # ctx[b, d] = sum_s attn[b, s] * src[b, d, s]  -> (B, Dsrc)
    # VPU broadcast-multiply (attn over sublanes) + lane reduce over S (XLU).
    ctx = jnp.sum(src * attn[:, None, :], axis=2)

    # tanh(output_proj(cat(ctx, input)))  -- concat folded into split/fused weights.
    out = jnp.tanh(
        jnp.dot(ctx, w_out_ctx_t_ref[...], preferred_element_type=jnp.float32) + inp_out
    )
    out_ref[...] = out.astype(out_ref.dtype)


def prepare_attention_params(w_in, w_out, source_embed_dim, dtype=jnp.float32):
    """One-time parameter preparation (call once at init, NOT per decode step).

    w_in  : (Dsrc, Din)        -- PyTorch nn.Linear weight layout
    w_out : (Dout, Dsrc + Din) -- PyTorch nn.Linear weight layout, cat order (ctx, input)

    Returns:
      w_inp_cat   : (Din, Dsrc + Dout)  fused weight for the single inp matmul
      w_out_ctx_t : (Dsrc, Dout)        ctx-half of output_proj
    """
    w_in_t = jnp.asarray(w_in, dtype).T                               # (Din, Dsrc)
    w_out_ctx_t = jnp.asarray(w_out[:, :source_embed_dim], dtype).T   # (Dsrc, Dout)
    w_out_inp_t = jnp.asarray(w_out[:, source_embed_dim:], dtype).T   # (Din, Dout)
    w_inp_cat = jnp.concatenate([w_in_t, w_out_inp_t], axis=1)        # (Din, Dsrc + Dout)
    return w_inp_cat, w_out_ctx_t


def prepare_encoder_inputs(src, mask, *, src_dtype=jnp.float32):
    """Once-per-sequence preparation of encoder-side constants (reused every decode step).

    src  : (S, B, Dsrc)  time-major encoder hidden states (fairseq convention)
    mask : (S, B)        nonzero == padded position (or None)
    src_dtype: jnp.bfloat16 on v6e/v7x to halve src DMA/VMEM; keep f32 on v5e
               (no bf16 VPU path there) and whenever extra precision is wanted.

    Returns:
      src_ls   : (B, Dsrc, S) with the 128-multiple S axis on lanes
      mask_add : (B, S) float32 additive mask, 0.0 keep / -1e30 pad
    """
    S, B, _ = src.shape
    src_ls = jnp.transpose(src, (1, 2, 0)).astype(src_dtype)          # (B, Dsrc, S)
    if mask is None:
        mask_add = jnp.zeros((B, S), jnp.float32)
    else:
        mask_add = jnp.where(jnp.transpose(mask) != 0, -1e30, 0.0).astype(jnp.float32)
    return src_ls, mask_add


def attention_step(inp, src_ls, mask_add, params):
    """Per-decode-step forward.

    inp      : (B, Din) float32 decoder state
    src_ls   : (B, Dsrc, S)  from prepare_encoder_inputs (per-sequence constant)
    mask_add : (B, S)        from prepare_encoder_inputs (per-sequence constant)
    params   : from prepare_attention_params
    Returns (x (B, Dout), attn (B, S)).  attn is batch-major; transpose only if a
    time-major (S, B) consumer requires it.
    """
    w_inp_cat, w_out_ctx_t = params
    B, _ = inp.shape
    _, Dsrc, S = src_ls.shape
    Dout = w_out_ctx_t.shape[1]

    vmem = pl.BlockSpec(memory_space=pltpu.MemorySpace.VMEM)
    out_x, attn_bm = pl.pallas_call(
        functools.partial(_attention_kernel, source_embed_dim=Dsrc),
        out_shape=(
            jax.ShapeDtypeStruct((B, Dout), jnp.float32),
            jax.ShapeDtypeStruct((B, S), jnp.float32),
        ),
        in_specs=[vmem] * 5,
        out_specs=(vmem, vmem),
    )(inp, src_ls, mask_add, w_inp_cat, w_out_ctx_t)
    return out_x, attn_bm


def reference(inp, src, mask, w_in, w_out):
    """Pure-JAX replica of the PyTorch forward (masked_fill(-inf) + softmax over time)."""
    x = inp @ w_in.T
    scores = jnp.sum(src * x[None], axis=2)
    scores = jnp.where(mask != 0, -jnp.inf, scores)
    attn = jax.nn.softmax(scores, axis=0)
    ctx = jnp.sum(attn[:, :, None] * src, axis=0)
    out = jnp.tanh(jnp.concatenate([ctx, inp], axis=1) @ w_out.T)
    return out, attn


if __name__ == "__main__":
    key = jax.random.PRNGKey(0)
    k1, k2, k3, k4, k5 = jax.random.split(key, 5)

    # S chosen as a multiple of 128 so the softmax axis is lane-dense.
    B, S = 8, 128
    Din, Dsrc, Dout = 32, 32, 32

    inp = jax.random.normal(k1, (B, Din), jnp.float32)
    src = jax.random.normal(k2, (S, B, Dsrc), jnp.float32)
    # padding mask: random pads, but keep first time step unmasked for every batch element
    mask = (jax.random.uniform(k3, (S, B)) > 0.7).astype(jnp.int32)
    mask = mask.at[0, :].set(0)

    # nn.Linear(..., bias=False).weight.uniform_(-0.1, 0.1)
    w_in = jax.random.uniform(k4, (Dsrc, Din), jnp.float32, -0.1, 0.1)
    w_out = jax.random.uniform(k5, (Dout, Dsrc + Din), jnp.float32, -0.1, 0.1)

    # Hoisted one-time / once-per-sequence preparation (NOT on the per-step path).
    params = prepare_attention_params(w_in, w_out, Dsrc)
    src_ls, mask_add = prepare_encoder_inputs(src, mask, src_dtype=jnp.float32)

    step = jax.jit(attention_step)
    out_x, attn_bm = step(inp, src_ls, mask_add, params)
    jax.block_until_ready((out_x, attn_bm))

    ref_x, ref_attn = reference(inp, src, mask, w_in, w_out)
    attn_tm = jnp.transpose(attn_bm)   # (S, B) only for comparison with the time-major reference
    assert jnp.allclose(out_x, ref_x, atol=1e-4, rtol=1e-4), float(jnp.max(jnp.abs(out_x - ref_x)))
    assert jnp.allclose(attn_tm, ref_attn, atol=1e-4, rtol=1e-4), float(jnp.max(jnp.abs(attn_tm - ref_attn)))

    print("KERNEL_OK")
</pallas_src>

<mosaic_0001>
module attributes {stable_mosaic.version = 11 : i64} {
  func.func @_attention_kernel(%arg0: memref<8x32xf32, #tpu.memory_space<vmem>>, %arg1: memref<8x32x128xf32, #tpu.memory_space<vmem>>, %arg2: memref<8x128xf32, #tpu.memory_space<vmem>>, %arg3: memref<32x64xf32, #tpu.memory_space<vmem>>, %arg4: memref<32x32xf32, #tpu.memory_space<vmem>>, %arg5: memref<8x32xf32, #tpu.memory_space<vmem>>, %arg6: memref<8x128xf32, #tpu.memory_space<vmem>>) attributes {dimension_semantics = [], scalar_prefetch = 0 : i64, scratch_operands = 0 : i64, tpu.core_type = #tpu.core_type<tc>} {
    %c0 = arith.constant 0 : index
    %c0_0 = arith.constant 0 : index
    %0 = vector.load %arg0[%c0, %c0_0] : memref<8x32xf32, #tpu.memory_space<vmem>>, vector<8x32xf32>
    %c0_1 = arith.constant 0 : index
    %c0_2 = arith.constant 0 : index
    %c0_3 = arith.constant 0 : index
    %1 = vector.load %arg1[%c0_1, %c0_2, %c0_3] : memref<8x32x128xf32, #tpu.memory_space<vmem>>, vector<8x32x128xf32>
    %c0_4 = arith.constant 0 : index
    %c0_5 = arith.constant 0 : index
    %2 = vector.load %arg2[%c0_4, %c0_5] : memref<8x128xf32, #tpu.memory_space<vmem>>, vector<8x128xf32>
    %c0_6 = arith.constant 0 : index
    %c0_7 = arith.constant 0 : index
    %3 = vector.load %arg3[%c0_6, %c0_7] : memref<32x64xf32, #tpu.memory_space<vmem>>, vector<32x64xf32>
    %cst = arith.constant dense<0.000000e+00> : vector<8x64xf32>
    %4 = tpu.matmul %0, %3, %cst {dimension_numbers = #tpu.dot_dimension_numbers<[1], [0], [0], [1], [0, 0, 1, 1], [], []>} : vector<8x32xf32>, vector<32x64xf32>, vector<8x64xf32> -> vector<8x64xf32>
    %5 = vector.extract_strided_slice %4 {offsets = [0, 0], sizes = [8, 32], strides = [1, 1]} : vector<8x64xf32> to vector<8x32xf32>
    %6 = vector.extract_strided_slice %4 {offsets = [0, 32], sizes = [8, 32], strides = [1, 1]} : vector<8x64xf32> to vector<8x32xf32>
    %7 = vector.shape_cast %5 : vector<8x32xf32> to vector<8x32x1xf32>
    %8 = vector.broadcast %7 : vector<8x32x1xf32> to vector<8x32x128xf32>
    %9 = arith.mulf %1, %8 : vector<8x32x128xf32>
    %cst_8 = arith.constant dense<0.000000e+00> : vector<8x128xf32>
    %10 = vector.multi_reduction <add>, %9, %cst_8 [1] : vector<8x32x128xf32> to vector<8x128xf32>
    %11 = arith.addf %10, %2 : vector<8x128xf32>
    %cst_9 = arith.constant dense<0xFF800000> : vector<8xf32>
    %12 = vector.multi_reduction <maximumf>, %11, %cst_9 [1] : vector<8x128xf32> to vector<8xf32>
    %13 = vector.shape_cast %12 : vector<8xf32> to vector<8x1xf32>
    %14 = vector.broadcast %13 : vector<8x1xf32> to vector<8x128xf32>
    %15 = arith.subf %11, %14 : vector<8x128xf32>
    %16 = math.exp %15 : vector<8x128xf32>
    %cst_10 = arith.constant dense<0.000000e+00> : vector<8xf32>
    %17 = vector.multi_reduction <add>, %16, %cst_10 [1] : vector<8x128xf32> to vector<8xf32>
    %18 = vector.shape_cast %17 : vector<8xf32> to vector<8x1xf32>
    %19 = vector.broadcast %18 : vector<8x1xf32> to vector<8x128xf32>
    %20 = arith.divf %16, %19 : vector<8x128xf32>
    %c0_11 = arith.constant 0 : index
    %c0_12 = arith.constant 0 : index
    %21 = vector.load %arg6[%c0_11, %c0_12] : memref<8x128xf32, #tpu.memory_space<vmem>>, vector<8x128xf32>
    tpu.vector_store %arg6[%c0_11, %c0_12], %20 {strides = array<i32>} : memref<8x128xf32, #tpu.memory_space<vmem>>, vector<8x128xf32>,
    %22 = vector.shape_cast %20 : vector<8x128xf32> to vector<8x1x128xf32>
    %23 = vector.broadcast %22 : vector<8x1x128xf32> to vector<8x32x128xf32>
    %24 = arith.mulf %1, %23 : vector<8x32x128xf32>
    %cst_13 = arith.constant dense<0.000000e+00> : vector<8x32xf32>
    %25 = vector.multi_reduction <add>, %24, %cst_13 [2] : vector<8x32x128xf32> to vector<8x32xf32>
    %c0_14 = arith.constant 0 : index
    %c0_15 = arith.constant 0 : index
    %26 = vector.load %arg4[%c0_14, %c0_15] : memref<32x32xf32, #tpu.memory_space<vmem>>, vector<32x32xf32>
    %cst_16 = arith.constant dense<0.000000e+00> : vector<8x32xf32>
    %27 = tpu.matmul %25, %26, %cst_16 {dimension_numbers = #tpu.dot_dimension_numbers<[1], [0], [0], [1], [0, 0, 1, 1], [], []>} : vector<8x32xf32>, vector<32x32xf32>, vector<8x32xf32> -> vector<8x32xf32>
    %28 = arith.addf %27, %6 : vector<8x32xf32>
    %29 = math.tanh %28 : vector<8x32xf32>
    %c0_17 = arith.constant 0 : index
    %c0_18 = arith.constant 0 : index
    %30 = vector.load %arg5[%c0_17, %c0_18] : memref<8x32xf32, #tpu.memory_space<vmem>>, vector<8x32xf32>
    tpu.vector_store %arg5[%c0_17, %c0_18], %29 {strides = array<i32>} : memref<8x32xf32, #tpu.memory_space<vmem>>, vector<8x32xf32>,
    return
  }
}

</mosaic_0001>

<llo_original>
// kernel: attention_step.1
$region0: #{attention_step.1}
  #allocation0 [shape = 'u32[]', space=smem, size = 0x4, offset = 0x4, fixed_abs, tag = 'smem constant byte address 0x4 - core index']
  #allocation1 [shape = 'u32[144,128]{1,0:T(1,128)}', space=vmem, size = 0x12000, scoped, tag = 'internal scratch']
  %s0 = inlined_call_operand.hbm [shape: f32[8,32], index: 0, kind: input, shape index: {}]
  %s1 = inlined_call_operand.hbm [shape: f32[8,32,128], index: 1, kind: input, shape index: {}]
  %s2 = inlined_call_operand.hbm [shape: f32[8,128], index: 2, kind: input, shape index: {}]
  %s3 = inlined_call_operand.hbm [shape: f32[32,64], index: 3, kind: input, shape index: {}]
  %s4 = inlined_call_operand.hbm [shape: f32[32,32], index: 4, kind: input, shape index: {}]
  %s5 = inlined_call_operand.hbm [shape: f32[8,32], index: 5, kind: output, shape index: {0}]
  %s6 = inlined_call_operand.hbm [shape: f32[8,128], index: 6, kind: output, shape index: {1}]
  %7 = xla_tuple %s5, %s6
  %s8 = sld [smem:[#allocation0]]
  $region58: #{attention_step.1} parent=0
    _
  %s10 = ssub.s32 1, %s8
  %s11 = scalar_select 0, %s10, %s8
  $region1: #{attention_step.1} parent=0
    #allocation2 [shape = 'u8[4096]{0}', space=vmem, size = 0x1000, scoped, tag = 'input window, operand 0, single buffered']
    #allocation3 [shape = 's32[1]{0}', space=sflag, size = 0x4, scoped, tag = 'scoped memory for attention_step.1']
    #allocation4 [shape = 's32[1]{0}', space=sflag, size = 0x4, scoped, tag = 'scoped memory for attention_step.1']
    #allocation5 [shape = 'u8[131072]{0}', space=vmem, size = 0x20000, scoped, tag = 'input window, operand 1, single buffered']
    #allocation6 [shape = 's32[1]{0}', space=sflag, size = 0x4, scoped, tag = 'scoped memory for attention_step.1']
    #allocation7 [shape = 'u8[4096]{0}', space=vmem, size = 0x1000, scoped, tag = 'input window, operand 2, single buffered']
    #allocation8 [shape = 'u8[16384]{0}', space=vmem, size = 0x4000, scoped, tag = 'input window, operand 3, single buffered']
    #allocation9 [shape = 's32[1]{0}', space=sflag, size = 0x4, scoped, tag = 'scoped memory for attention_step.1']
    #allocation10 [shape = 'u8[16384]{0}', space=vmem, size = 0x4000, scoped, tag = 'input window, operand 4, single buffered']
    #allocation11 [shape = 'u8[4096]{0}', space=vmem, size = 0x1000, scoped, tag = 'output window, operand 0, single buffered']
    #allocation12 [shape = 'u8[4096]{0}', space=vmem, size = 0x1000, scoped, tag = 'output window, operand 1, single buffered']
    #allocation13 [shape = 's32[1]{0}', space=sflag, size = 0x4, scoped, tag = 'scoped memory for attention_step.1']
    %12 = vsyncpa [#allocation3], 0
    %13 = vsyncpa [#allocation6], 0
    %14 = vsyncpa [#allocation9], 0
    %15 = vsyncpa [#allocation4], 0
    %16 = vsyncpa [#allocation13], 0
    // Predicated region
    $region2: #{attention_step.1} parent=1 // pred_check
      _
    $region3: #{attention_step.1} parent=1 // pred_check_branch
      %18 = sbr.rel (0) target = $region5
    $region4: #{attention_step.1} parent=1 // pred_region
      %s20 = ssub.s32 128, 128
      %21 = vsyncadd [#allocation3], %s20
      %s23 = sshll.u32 [#allocation2], 4
      %s24 = int_to_ptr.vmem [resolvable:$true] %s23
      %26 = dma.hbm_to_vmem [thread:$0]  %s0, 128, %s24, [#allocation3]
    $region5: #{attention_step.1} parent=1 // pred_fallthru
      _
    // Predicated region
    $region6: #{attention_step.1} parent=1 // pred_check
      _
    $region7: #{attention_step.1} parent=1 // pred_check_branch
      %28 = sbr.rel (0) target = $region9
    $region8: #{attention_step.1} parent=1 // pred_region
      %s30 = ssub.s32 4096, 4096
      %31 = vsyncadd [#allocation6], %s30
      %s32 = sshll.u32 [#allocation5], 4
      %s33 = int_to_ptr.vmem [resolvable:$true] %s32
      %38 = dma.hbm_to_vmem [thread:$0]  %s1, 4096, %s33, [#allocation6], 128, 128, 8
    $region9: #{attention_step.1} parent=1 // pred_fallthru
      _
    // Predicated region
    $region10: #{attention_step.1} parent=1 // pred_check
      _
    $region11: #{attention_step.1} parent=1 // pred_check_branch
      %40 = sbr.rel (0) target = $region13
    $region12: #{attention_step.1} parent=1 // pred_region
      %s42 = ssub.s32 128, 128
      %43 = vsyncadd [#allocation6], %s42
      %s45 = sshll.u32 [#allocation7], 4
      %s46 = int_to_ptr.vmem [resolvable:$true] %s45
      %48 = dma.hbm_to_vmem [thread:$0]  %s2, 128, %s46, [#allocation6]
    $region13: #{attention_step.1} parent=1 // pred_fallthru
      _
    // Predicated region
    $region14: #{attention_step.1} parent=1 // pred_check
      _
    $region15: #{attention_step.1} parent=1 // pred_check_branch
      %50 = sbr.rel (0) target = $region17
    $region16: #{attention_step.1} parent=1 // pred_region
      %s52 = ssub.s32 512, 512
      %53 = vsyncadd [#allocation9], %s52
      %s54 = sshll.u32 [#allocation8], 4
      %s55 = int_to_ptr.vmem [resolvable:$true] %s54
      %60 = dma.hbm_to_vmem [thread:$0]  %s3, 512, %s55, [#allocation9], 128, 128, 8
    $region17: #{attention_step.1} parent=1 // pred_fallthru
      _
    // Predicated region
    $region18: #{attention_step.1} parent=1 // pred_check
      _
    $region19: #{attention_step.1} parent=1 // pred_check_branch
      %62 = sbr.rel (0) target = $region21
    $region20: #{attention_step.1} parent=1 // pred_region
      %s64 = ssub.s32 512, 512
      %65 = vsyncadd [#allocation9], %s64
      %s66 = sshll.u32 [#allocation10], 4
      %s67 = int_to_ptr.vmem [resolvable:$true] %s66
      %72 = dma.hbm_to_vmem [thread:$0]  %s4, 512, %s67, [#allocation9], 128, 128, 8
    $region21: #{attention_step.1} parent=1 // pred_fallthru
      _
    // Predicated region
    $region22: #{attention_step.1} parent=1 // pred_check
      _
    $region23: #{attention_step.1} parent=1 // pred_check_branch
      %74 = sbr.rel (0) target = $region25
    $region24: #{attention_step.1} parent=1 // pred_region
      %75 = dma.done [#allocation3], 128
    $region25: #{attention_step.1} parent=1 // pred_fallthru
      _
    // Predicated region
    $region26: #{attention_step.1} parent=1 // pred_check
      _
    $region27: #{attention_step.1} parent=1 // pred_check_branch
      %77 = sbr.rel (0) target = $region29
    $region28: #{attention_step.1} parent=1 // pred_region
      %78 = dma.done [#allocation6], 4096
    $region29: #{attention_step.1} parent=1 // pred_fallthru
      _
    // Predicated region
    $region30: #{attention_step.1} parent=1 // pred_check
      _
    $region31: #{attention_step.1} parent=1 // pred_check_branch
      %80 = sbr.rel (0) target = $region33
    $region32: #{attention_step.1} parent=1 // pred_region
      %81 = dma.done [#allocation6], 128
    $region33: #{attention_step.1} parent=1 // pred_fallthru
      _
    // Predicated region
    $region34: #{attention_step.1} parent=1 // pred_check
      _
    $region35: #{attention_step.1} parent=1 // pred_check_branch
      %83 = sbr.rel (0) target = $region37
    $region36: #{attention_step.1} parent=1 // pred_region
      %84 = dma.done [#allocation9], 512
    $region37: #{attention_step.1} parent=1 // pred_fallthru
      _
    // Predicated region
    $region38: #{attention_step.1} parent=1 // pred_check
      _
    $region39: #{attention_step.1} parent=1 // pred_check_branch
      %86 = sbr.rel (0) target = $region41
    $region40: #{attention_step.1} parent=1 // pred_region
      %87 = dma.done [#allocation9], 512
    $region41: #{attention_step.1} parent=1 // pred_fallthru
      _
    %v88 = vld [vmem:[#allocation2] sm:$0xff]
    %v89 = vld [vmem:[#allocation5] sm:$0xff]
    %v90 = vld [vmem:[#allocation5 + $0x8] sm:$0xff]
    %v91 = vld [vmem:[#allocation5 + $0x10] sm:$0xff]
    %v92 = vld [vmem:[#allocation5 + $0x18] sm:$0xff]
    %v93 = vld [vmem:[#allocation5 + $0x20] sm:$0xff]
    %v94 = vld [vmem:[#allocation5 + $0x28] sm:$0xff]
    %v95 = vld [vmem:[#allocation5 + $0x30] sm:$0xff]
    %v96 = vld [vmem:[#allocation5 + $0x38] sm:$0xff]
    %v97 = vld [vmem:[#allocation5 + $0x40] sm:$0xff]
    %v98 = vld [vmem:[#allocation5 + $0x48] sm:$0xff]
    %v99 = vld [vmem:[#allocation5 + $0x50] sm:$0xff]
    %v100 = vld [vmem:[#allocation5 + $0x58] sm:$0xff]
    %v101 = vld [vmem:[#allocation5 + $0x60] sm:$0xff]
    %v102 = vld [vmem:[#allocation5 + $0x68] sm:$0xff]
    %v103 = vld [vmem:[#allocation5 + $0x70] sm:$0xff]
    %v104 = vld [vmem:[#allocation5 + $0x78] sm:$0xff]
    %v105 = vld [vmem:[#allocation5 + $0x80] sm:$0xff]
    %v106 = vld [vmem:[#allocation5 + $0x88] sm:$0xff]
    %v107 = vld [vmem:[#allocation5 + $0x90] sm:$0xff]
    %v108 = vld [vmem:[#allocation5 + $0x98] sm:$0xff]
    %v109 = vld [vmem:[#allocation5 + $0xa0] sm:$0xff]
    %v110 = vld [vmem:[#allocation5 + $0xa8] sm:$0xff]
    %v111 = vld [vmem:[#allocation5 + $0xb0] sm:$0xff]
    %v112 = vld [vmem:[#allocation5 + $0xb8] sm:$0xff]
    %v113 = vld [vmem:[#allocation5 + $0xc0] sm:$0xff]
    %v114 = vld [vmem:[#allocation5 + $0xc8] sm:$0xff]
    %v115 = vld [vmem:[#allocation5 + $0xd0] sm:$0xff]
    %v116 = vld [vmem:[#allocation5 + $0xd8] sm:$0xff]
    %v117 = vld [vmem:[#allocation5 + $0xe0] sm:$0xff]
    %v118 = vld [vmem:[#allocation5 + $0xe8] sm:$0xff]
    %v119 = vld [vmem:[#allocation5 + $0xf0] sm:$0xff]
    %v120 = vld [vmem:[#allocation5 + $0xf8] sm:$0xff]
    %v121 = vld [vmem:[#allocation7] sm:$0xff]
    %v122 = vld [vmem:[#allocation8] sm:$0xff]
    %v123 = vld [vmem:[#allocation8 + $0x8] sm:$0xff]
    %v124 = vld [vmem:[#allocation8 + $0x10] sm:$0xff]
    %v125 = vld [vmem:[#allocation8 + $0x18] sm:$0xff]
    %vm126 = vcmask 261120
    %v128 = vsel %vm126, %v88, 0
    %130 = vmatprep.subr.mxu0 0.0
    %131 = vmatpush1.msra.mxu0 %v122
    %132 = vmatprep.subr.mxu0 0.0
    %133 = vmatpush1.msra.mxu0 %v123
    %134 = vmatprep.subr.mxu0 0.0
    %135 = vmatpush1.msra.mxu0 %v124
    %136 = vmatprep.subr.mxu0 0.0
    %137 = vmatpush1.msra.mxu0 %v125
    %138 = vmatprep.subr.mxu0 0.0
    %139 = vmatpush1.msra.mxu0 0.0
    %140 = vmatprep.subr.mxu0 0.0
    %141 = vmatpush1.msra.mxu0 0.0
    %142 = vmatprep.subr.mxu0 0.0
    %143 = vmatpush1.msra.mxu0 0.0
    %144 = vmatprep.subr.mxu0 0.0
    %145 = vmatpush1.msra.mxu0 0.0
    %146 = vmatprep.subr.mxu0 0.0
    %147 = vmatpush1.msra.mxu0 0.0
    %148 = vmatprep.subr.mxu0 0.0
    %149 = vmatpush1.msra.mxu0 0.0
    %150 = vmatprep.subr.mxu0 0.0
    %151 = vmatpush1.msra.mxu0 0.0
    %152 = vmatprep.subr.mxu0 0.0
    %153 = vmatpush1.msra.mxu0 0.0
    %154 = vmatprep.subr.mxu0 0.0
    %155 = vmatpush1.msra.mxu0 0.0
    %156 = vmatprep.subr.mxu0 0.0
    %157 = vmatpush1.msra.mxu0 0.0
    %158 = vmatprep.subr.mxu0 0.0
    %159 = vmatpush1.msra.mxu0 0.0
    %160 = vmatprep.subr.mxu0 0.0
    %161 = vmatpush1.msra.mxu0 0.0
    %162 = vmatprep.subr.mxu0 0.0
    %163 = vmatpush1.msra.mxu0 0.0
    %164 = vmatprep.subr.mxu0 0.0
    %165 = vmatpush1.msra.mxu0 0.0
    %166 = vmatprep.subr.mxu0 0.0
    %167 = vmatpush1.msra.mxu0 0.0
    %168 = vmatprep.subr.mxu0 0.0
    %169 = vmatpush1.msra.mxu0 0.0
    %170 = vmatprep.subr.mxu0 0.0
    %171 = vmatpush1.msra.mxu0 0.0
    %172 = vmatprep.subr.mxu0 0.0
    %173 = vmatpush1.msra.mxu0 0.0
    %174 = vmatprep.subr.mxu0 0.0
    %175 = vmatpush1.msra.mxu0 0.0
    %176 = vmatprep.subr.mxu0 0.0
    %177 = vmatpush1.msra.mxu0 0.0
    %178 = vmatprep.subr.mxu0 0.0
    %179 = vmatpush1.msra.mxu0 0.0
    %180 = vmatprep.subr.mxu0 0.0
    %181 = vmatpush1.msra.mxu0 0.0
    %182 = vmatprep.subr.mxu0 0.0
    %183 = vmatpush1.msra.mxu0 0.0
    %184 = vmatprep.subr.mxu0 0.0
    %185 = vmatpush1.msra.mxu0 0.0
    %186 = vmatprep.subr.mxu0 0.0
    %187 = vmatpush1.msra.mxu0 0.0
    %188 = vmatprep.subr.mxu0 0.0
    %189 = vmatpush1.msra.mxu0 0.0
    %190 = vmatprep.subr.mxu0 0.0
    %191 = vmatpush1.msra.mxu0 0.0
    %192 = vmatprep.subr.mxu0 0.0
    %193 = vmatpush1.msra.mxu0 0.0
    %194 = vmatprep.mubr.f32.mxu0 0.0
    %195 = vmatmul.mubr.f32.gmra.mrb[0].mxu0 %v128
    %v196 = vpop.f32.mrb[0].mxu0
    %v197 = vadd.f32 0.0, %v196
    %v198 = vpop.f32.mrb[0].mxu0
    %199 = vdwg.mxu0
    %v200 = vlaneseq
    %v201 = vshrl.u32 %v200, 7
    %v202 = vsub.s32 0, %v201
    %v203 = vrot.slane %v197, %v202
    %205 = vbcast.lane.b32.xlu0 %v203, 256
    %v206 = vpop.permute.xlu0 %205
    %s208 = sor.u32 256, 8
    %209 = vbcast.lane.b32.xlu0 %v203, %s208
    %v210 = vpop.permute.xlu0 %209
    %s212 = sor.u32 256, 16
    %213 = vbcast.lane.b32.xlu0 %v203, %s212
    %v214 = vpop.permute.xlu0 %213
    %s216 = sor.u32 256, 24
    %217 = vbcast.lane.b32.xlu0 %v203, %s216
    %v218 = vpop.permute.xlu0 %217
    %v219 = vlaneseq
    %v220 = vshrl.u32 %v219, 7
    %v221 = vsub.s32 1, %v220
    %v222 = vrot.slane %v197, %v221
    %224 = vbcast.lane.b32.xlu0 %v222, 256
    %v225 = vpop.permute.xlu0 %224
    %s227 = sor.u32 256, 8
    %228 = vbcast.lane.b32.xlu0 %v222, %s227
    %v229 = vpop.permute.xlu0 %228
    %s231 = sor.u32 256, 16
    %232 = vbcast.lane.b32.xlu0 %v222, %s231
    %v233 = vpop.permute.xlu0 %232
    %s235 = sor.u32 256, 24
    %236 = vbcast.lane.b32.xlu0 %v222, %s235
    %v237 = vpop.permute.xlu0 %236
    %v238 = vlaneseq
    %v239 = vshrl.u32 %v238, 7
    %v240 = vsub.s32 2, %v239
    %v241 = vrot.slane %v197, %v240
    %243 = vbcast.lane.b32.xlu0 %v241, 256
    %v244 = vpop.permute.xlu0 %243
    %s246 = sor.u32 256, 8
    %247 = vbcast.lane.b32.xlu0 %v241, %s246
    %v248 = vpop.permute.xlu0 %247
    %s250 = sor.u32 256, 16
    %251 = vbcast.lane.b32.xlu0 %v241, %s250
    %v252 = vpop.permute.xlu0 %251
    %s254 = sor.u32 256, 24
    %255 = vbcast.lane.b32.xlu0 %v241, %s254
    %v256 = vpop.permute.xlu0 %255
    %v257 = vlaneseq
    %v258 = vshrl.u32 %v257, 7
    %v259 = vsub.s32 3, %v258
    %v260 = vrot.slane %v197, %v259
    %262 = vbcast.lane.b32.xlu0 %v260, 256
    %v263 = vpop.permute.xlu0 %262
    %s265 = sor.u32 256, 8
    %266 = vbcast.lane.b32.xlu0 %v260, %s265
    %v267 = vpop.permute.xlu0 %266
    %s269 = sor.u32 256, 16
    %270 = vbcast.lane.b32.xlu0 %v260, %s269
    %v271 = vpop.permute.xlu0 %270
    %s273 = sor.u32 256, 24
    %274 = vbcast.lane.b32.xlu0 %v260, %s273
    %v275 = vpop.permute.xlu0 %274
    %v276 = vlaneseq
    %v277 = vshrl.u32 %v276, 7
    %v278 = vsub.s32 4, %v277
    %v279 = vrot.slane %v197, %v278
    %281 = vbcast.lane.b32.xlu0 %v279, 256
    %v282 = vpop.permute.xlu0 %281
    %s284 = sor.u32 256, 8
    %285 = vbcast.lane.b32.xlu0 %v279, %s284
    %v286 = vpop.permute.xlu0 %285
    %s288 = sor.u32 256, 16
    %289 = vbcast.lane.b32.xlu0 %v279, %s288
    %v290 = vpop.permute.xlu0 %289
    %s292 = sor.u32 256, 24
    %293 = vbcast.lane.b32.xlu0 %v279, %s292
    %v294 = vpop.permute.xlu0 %293
    %v295 = vlaneseq
    %v296 = vshrl.u32 %v295, 7
    %v297 = vsub.s32 5, %v296
    %v298 = vrot.slane %v197, %v297
    %300 = vbcast.lane.b32.xlu0 %v298, 256
    %v301 = vpop.permute.xlu0 %300
    %s303 = sor.u32 256, 8
    %304 = vbcast.lane.b32.xlu0 %v298, %s303
    %v305 = vpop.permute.xlu0 %304
    %s307 = sor.u32 256, 16
    %308 = vbcast.lane.b32.xlu0 %v298, %s307
    %v309 = vpop.permute.xlu0 %308
    %s311 = sor.u32 256, 24
    %312 = vbcast.lane.b32.xlu0 %v298, %s311
    %v313 = vpop.permute.xlu0 %312
    %v314 = vlaneseq
    %v315 = vshrl.u32 %v314, 7
    %v316 = vsub.s32 6, %v315
    %v317 = vrot.slane %v197, %v316
    %319 = vbcast.lane.b32.xlu0 %v317, 256
    %v320 = vpop.permute.xlu0 %319
    %s322 = sor.u32 256, 8
    %323 = vbcast.lane.b32.xlu0 %v317, %s322
    %v324 = vpop.permute.xlu0 %323
    %s326 = sor.u32 256, 16
    %327 = vbcast.lane.b32.xlu0 %v317, %s326
    %v328 = vpop.permute.xlu0 %327
    %s330 = sor.u32 256, 24
    %331 = vbcast.lane.b32.xlu0 %v317, %s330
    %v332 = vpop.permute.xlu0 %331
    %v333 = vlaneseq
    %v334 = vshrl.u32 %v333, 7
    %v335 = vsub.s32 7, %v334
    %v336 = vrot.slane %v197, %v335
    %338 = vbcast.lane.b32.xlu0 %v336, 256
    %v339 = vpop.permute.xlu0 %338
    %s341 = sor.u32 256, 8
    %342 = vbcast.lane.b32.xlu0 %v336, %s341
    %v343 = vpop.permute.xlu0 %342
    %s345 = sor.u32 256, 16
    %346 = vbcast.lane.b32.xlu0 %v336, %s345
    %v347 = vpop.permute.xlu0 %346
    %s349 = sor.u32 256, 24
    %350 = vbcast.lane.b32.xlu0 %v336, %s349
    %v351 = vpop.permute.xlu0 %350
    %v352 = vmul.f32 %v89, %v206
    %v353 = vmul.f32 %v90, %v210
    %v354 = vmul.f32 %v91, %v214
    %v355 = vmul.f32 %v92, %v218
    %v356 = vmul.f32 %v93, %v225
    %v357 = vmul.f32 %v94, %v229
    %v358 = vmul.f32 %v95, %v233
    %v359 = vmul.f32 %v96, %v237
    %v360 = vmul.f32 %v97, %v244
    %v361 = vmul.f32 %v98, %v248
    %v362 = vmul.f32 %v99, %v252
    %v363 = vmul.f32 %v100, %v256
    %v364 = vmul.f32 %v101, %v263
    %v365 = vmul.f32 %v102, %v267
    %v366 = vmul.f32 %v103, %v271
    %v367 = vmul.f32 %v104, %v275
    %v368 = vmul.f32 %v105, %v282
    %v369 = vmul.f32 %v106, %v286
    %v370 = vmul.f32 %v107, %v290
    %v371 = vmul.f32 %v108, %v294
    %v372 = vmul.f32 %v109, %v301
    %v373 = vmul.f32 %v110, %v305
    %v374 = vmul.f32 %v111, %v309
    %v375 = vmul.f32 %v112, %v313
    %v376 = vmul.f32 %v113, %v320
    %v377 = vmul.f32 %v114, %v324
    %v378 = vmul.f32 %v115, %v328
    %v379 = vmul.f32 %v116, %v332
    %v380 = vmul.f32 %v117, %v339
    %v381 = vmul.f32 %v118, %v343
    %v382 = vmul.f32 %v119, %v347
    %v383 = vmul.f32 %v120, %v351
    %v384 = vadd.f32 %v352, %v353
    %v385 = vadd.f32 %v384, %v354
    %v386 = vadd.f32 %v385, %v355
    %v387 = vrot.slane %v386, 4
    %v388 = vadd.f32 %v386, %v387
    %v389 = vrot.slane %v388, 2
    %v390 = vadd.f32 %v388, %v389
    %v391 = vrot.slane %v390, 1
    %v392 = vadd.f32 %v390, %v391
    %v393 = vadd.f32 %v356, %v357
    %v394 = vadd.f32 %v393, %v358
    %v395 = vadd.f32 %v394, %v359
    %v396 = vrot.slane %v395, 4
    %v397 = vadd.f32 %v395, %v396
    %v398 = vrot.slane %v397, 2
    %v399 = vadd.f32 %v397, %v398
    %v400 = vrot.slane %v399, 1
    %v401 = vadd.f32 %v399, %v400
    %v402 = vadd.f32 %v360, %v361
    %v403 = vadd.f32 %v402, %v362
    %v404 = vadd.f32 %v403, %v363
    %v405 = vrot.slane %v404, 4
    %v406 = vadd.f32 %v404, %v405
    %v407 = vrot.slane %v406, 2
    %v408 = vadd.f32 %v406, %v407
    %v409 = vrot.slane %v408, 1
    %v410 = vadd.f32 %v408, %v409
    %v411 = vadd.f32 %v364, %v365
    %v412 = vadd.f32 %v411, %v366
    %v413 = vadd.f32 %v412, %v367
    %v414 = vrot.slane %v413, 4
    %v415 = vadd.f32 %v413, %v414
    %v416 = vrot.slane %v415, 2
    %v417 = vadd.f32 %v415, %v416
    %v418 = vrot.slane %v417, 1
    %v419 = vadd.f32 %v417, %v418
    %v420 = vadd.f32 %v368, %v369
    %v421 = vadd.f32 %v420, %v370
    %v422 = vadd.f32 %v421, %v371
    %v423 = vrot.slane %v422, 4
    %v424 = vadd.f32 %v422, %v423
    %v425 = vrot.slane %v424, 2
    %v426 = vadd.f32 %v424, %v425
    %v427 = vrot.slane %v426, 1
    %v428 = vadd.f32 %v426, %v427
    %v429 = vadd.f32 %v372, %v373
    %v430 = vadd.f32 %v429, %v374
    %v431 = vadd.f32 %v430, %v375
    %v432 = vrot.slane %v431, 4
    %v433 = vadd.f32 %v431, %v432
    %v434 = vrot.slane %v433, 2
    %v435 = vadd.f32 %v433, %v434
    %v436 = vrot.slane %v435, 1
    %v437 = vadd.f32 %v435, %v436
    %v438 = vadd.f32 %v376, %v377
    %v439 = vadd.f32 %v438, %v378
    %v440 = vadd.f32 %v439, %v379
    %v441 = vrot.slane %v440, 4
    %v442 = vadd.f32 %v440, %v441
    %v443 = vrot.slane %v442, 2
    %v444 = vadd.f32 %v442, %v443
    %v445 = vrot.slane %v444, 1
    %v446 = vadd.f32 %v444, %v445
    %v447 = vadd.f32 %v380, %v381
    %v448 = vadd.f32 %v447, %v382
    %v449 = vadd.f32 %v448, %v383
    %v450 = vrot.slane %v449, 4
    %v451 = vadd.f32 %v449, %v450
    %v452 = vrot.slane %v451, 2
    %v453 = vadd.f32 %v451, %v452
    %v454 = vrot.slane %v453, 1
    %v455 = vadd.f32 %v453, %v454
    %v457 = vrot.slane %v121, 1
    %v458 = vrot.slane %v121, 2
    %v459 = vrot.slane %v121, 3
    %v460 = vrot.slane %v121, 4
    %v461 = vrot.slane %v121, 5
    %v462 = vrot.slane %v121, 6
    %v463 = vrot.slane %v121, 7
    %v472 = vadd.f32 %v392, %v121
    %v473 = vadd.f32 %v401, %v457
    %v474 = vadd.f32 %v410, %v458
    %v475 = vadd.f32 %v419, %v459
    %v476 = vadd.f32 %v428, %v460
    %v477 = vadd.f32 %v437, %v461
    %v478 = vadd.f32 %v446, %v462
    %v479 = vadd.f32 %v455, %v463
    %v488 = vrot.slane %v473, 7
    %vm489 = vcmask 1041409
    %v490 = vsel %vm489, %v488, %v472
    %v491 = vrot.slane %v474, 6
    %vm492 = vcmask 1042434
    %v493 = vsel %vm492, %v491, %v490
    %v494 = vrot.slane %v475, 5
    %vm495 = vcmask 1043459
    %v496 = vsel %vm495, %v494, %v493
    %v497 = vrot.slane %v476, 4
    %vm498 = vcmask 1044484
    %v499 = vsel %vm498, %v497, %v496
    %v500 = vrot.slane %v477, 3
    %vm501 = vcmask 1045509
    %v502 = vsel %vm501, %v500, %v499
    %v503 = vrot.slane %v478, 2
    %vm504 = vcmask 1046534
    %v505 = vsel %vm504, %v503, %v502
    %v506 = vrot.slane %v479, 1
    %vm507 = vcmask 1047559
    %v508 = vsel %vm507, %v506, %v505
    %510 = vmax.xlane.f32.xlu0 %v508
    %v511 = vpop.xlane.xlu0 %510
    %v513 = vrot.slane %v511, 1
    %v514 = vrot.slane %v511, 2
    %v515 = vrot.slane %v511, 3
    %v516 = vrot.slane %v511, 4
    %v517 = vrot.slane %v511, 5
    %v518 = vrot.slane %v511, 6
    %v519 = vrot.slane %v511, 7
    %v528 = vsub.f32 %v472, %v511
    %v529 = vsub.f32 %v473, %v513
    %v530 = vsub.f32 %v474, %v514
    %v531 = vsub.f32 %v475, %v515
    %v532 = vsub.f32 %v476, %v516
    %v533 = vsub.f32 %v477, %v517
    %v534 = vsub.f32 %v478, %v518
    %v535 = vsub.f32 %v479, %v519
    %v536 = vmul.f32 %v528, 1.442695
    %v537 = vpow.pop %v536
    %v538 = vmul.f32 %v529, 1.442695
    %v539 = vpow.pop %v538
    %v540 = vmul.f32 %v530, 1.442695
    %v541 = vpow.pop %v540
    %v542 = vmul.f32 %v531, 1.442695
    %v543 = vpow.pop %v542
    %v544 = vmul.f32 %v532, 1.442695
    %v545 = vpow.pop %v544
    %v546 = vmul.f32 %v533, 1.442695
    %v547 = vpow.pop %v546
    %v548 = vmul.f32 %v534, 1.442695
    %v549 = vpow.pop %v548
    %v550 = vmul.f32 %v535, 1.442695
    %v551 = vpow.pop %v550
    %v560 = vrot.slane %v539, 7
    %v561 = vsel %vm489, %v560, %v537
    %v562 = vrot.slane %v541, 6
    %v563 = vsel %vm492, %v562, %v561
    %v564 = vrot.slane %v543, 5
    %v565 = vsel %vm495, %v564, %v563
    %v566 = vrot.slane %v545, 4
    %v567 = vsel %vm498, %v566, %v565
    %v568 = vrot.slane %v547, 3
    %v569 = vsel %vm501, %v568, %v567
    %v570 = vrot.slane %v549, 2
    %v571 = vsel %vm504, %v570, %v569
    %v572 = vrot.slane %v551, 1
    %v573 = vsel %vm507, %v572, %v571
    %575 = vadd.xlane.f32.xlu0 %v573
    %v576 = vpop.xlane.xlu0 %575
    %v578 = vrot.slane %v576, 1
    %v579 = vrot.slane %v576, 2
    %v580 = vrot.slane %v576, 3
    %v581 = vrot.slane %v576, 4
    %v582 = vrot.slane %v576, 5
    %v583 = vrot.slane %v576, 6
    %v584 = vrot.slane %v576, 7
    %v593 = vrcp.pop %v576
    %v594 = vmul.f32 %v537, %v593
    %v595 = vrcp.pop %v578
    %v596 = vmul.f32 %v539, %v595
    %v597 = vrcp.pop %v579
    %v598 = vmul.f32 %v541, %v597
    %v599 = vrcp.pop %v580
    %v600 = vmul.f32 %v543, %v599
    %v601 = vrcp.pop %v581
    %v602 = vmul.f32 %v545, %v601
    %v603 = vrcp.pop %v582
    %v604 = vmul.f32 %v547, %v603
    %v605 = vrcp.pop %v583
    %v606 = vmul.f32 %v549, %v605
    %v607 = vrcp.pop %v584
    %v608 = vmul.f32 %v551, %v607
    %v617 = vrot.slane %v596, 7
    %v618 = vsel %vm489, %v617, %v594
    %v619 = vrot.slane %v598, 6
    %v620 = vsel %vm492, %v619, %v618
    %v621 = vrot.slane %v600, 5
    %v622 = vsel %vm495, %v621, %v620
    %v623 = vrot.slane %v602, 4
    %v624 = vsel %vm498, %v623, %v622
    %v625 = vrot.slane %v604, 3
    %v626 = vsel %vm501, %v625, %v624
    %v627 = vrot.slane %v606, 2
    %v628 = vsel %vm504, %v627, %v626
    %v629 = vrot.slane %v608, 1
    %v630 = vsel %vm507, %v629, %v628
    %632 = vst [vmem:[#allocation12] sm:$0xff] %v630
    %v633 = vlaneseq
    %v634 = vshrl.u32 %v633, 7
    %v635 = vsub.s32 0, %v634
    %v636 = vrot.slane %v594, %v635
    %v637 = vlaneseq
    %v638 = vshrl.u32 %v637, 7
    %v639 = vsub.s32 0, %v638
    %v640 = vrot.slane %v596, %v639
    %v641 = vlaneseq
    %v642 = vshrl.u32 %v641, 7
    %v643 = vsub.s32 0, %v642
    %v644 = vrot.slane %v598, %v643
    %v645 = vlaneseq
    %v646 = vshrl.u32 %v645, 7
    %v647 = vsub.s32 0, %v646
    %v648 = vrot.slane %v600, %v647
    %v649 = vlaneseq
    %v650 = vshrl.u32 %v649, 7
    %v651 = vsub.s32 0, %v650
    %v652 = vrot.slane %v602, %v651
    %v653 = vlaneseq
    %v654 = vshrl.u32 %v653, 7
    %v655 = vsub.s32 0, %v654
    %v656 = vrot.slane %v604, %v655
    %v657 = vlaneseq
    %v658 = vshrl.u32 %v657, 7
    %v659 = vsub.s32 0, %v658
    %v660 = vrot.slane %v606, %v659
    %v661 = vlaneseq
    %v662 = vshrl.u32 %v661, 7
    %v663 = vsub.s32 0, %v662
    %v664 = vrot.slane %v608, %v663
    %v665 = vmul.f32 %v89, %v636
    %v666 = vmul.f32 %v90, %v636
    %v667 = vmul.f32 %v91, %v636
    %v668 = vmul.f32 %v92, %v636
    %v669 = vmul.f32 %v93, %v640
    %v670 = vmul.f32 %v94, %v640
    %v671 = vmul.f32 %v95, %v640
    %v672 = vmul.f32 %v96, %v640
    %v673 = vmul.f32 %v97, %v644
    %v674 = vmul.f32 %v98, %v644
    %v675 = vmul.f32 %v99, %v644
    %v676 = vmul.f32 %v100, %v644
    %v677 = vmul.f32 %v101, %v648
    %v678 = vmul.f32 %v102, %v648
    %v679 = vmul.f32 %v103, %v648
    %v680 = vmul.f32 %v104, %v648
    %v681 = vmul.f32 %v105, %v652
    %v682 = vmul.f32 %v106, %v652
    %v683 = vmul.f32 %v107, %v652
    %v684 = vmul.f32 %v108, %v652
    %v685 = vmul.f32 %v109, %v656
    %v686 = vmul.f32 %v110, %v656
    %v687 = vmul.f32 %v111, %v656
    %v688 = vmul.f32 %v112, %v656
    %v689 = vmul.f32 %v113, %v660
    %v690 = vmul.f32 %v114, %v660
    %v691 = vmul.f32 %v115, %v660
    %v692 = vmul.f32 %v116, %v660
    %v693 = vmul.f32 %v117, %v664
    %v694 = vmul.f32 %v118, %v664
    %v695 = vmul.f32 %v119, %v664
    %v696 = vmul.f32 %v120, %v664
    %697 = vadd.xlane.f32.xlu0 %v665
    %v698 = vpop.xlane.xlu0 %697
    %699 = vadd.xlane.f32.xlu0 %v666
    %v700 = vpop.xlane.xlu0 %699
    %701 = vadd.xlane.f32.xlu0 %v667
    %v702 = vpop.xlane.xlu0 %701
    %703 = vadd.xlane.f32.xlu0 %v668
    %v704 = vpop.xlane.xlu0 %703
    %705 = vadd.xlane.f32.xlu0 %v669
    %v706 = vpop.xlane.xlu0 %705
    %707 = vadd.xlane.f32.xlu0 %v670
    %v708 = vpop.xlane.xlu0 %707
    %709 = vadd.xlane.f32.xlu0 %v671
    %v710 = vpop.xlane.xlu0 %709
    %711 = vadd.xlane.f32.xlu0 %v672
    %v712 = vpop.xlane.xlu0 %711
    %713 = vadd.xlane.f32.xlu0 %v673
    %v714 = vpop.xlane.xlu0 %713
    %715 = vadd.xlane.f32.xlu0 %v674
    %v716 = vpop.xlane.xlu0 %715
    %717 = vadd.xlane.f32.xlu0 %v675
    %v718 = vpop.xlane.xlu0 %717
    %719 = vadd.xlane.f32.xlu0 %v676
    %v720 = vpop.xlane.xlu0 %719
    %721 = vadd.xlane.f32.xlu0 %v677
    %v722 = vpop.xlane.xlu0 %721
    %723 = vadd.xlane.f32.xlu0 %v678
    %v724 = vpop.xlane.xlu0 %723
    %725 = vadd.xlane.f32.xlu0 %v679
    %v726 = vpop.xlane.xlu0 %725
    %727 = vadd.xlane.f32.xlu0 %v680
    %v728 = vpop.xlane.xlu0 %727
    %729 = vadd.xlane.f32.xlu0 %v681
    %v730 = vpop.xlane.xlu0 %729
    %731 = vadd.xlane.f32.xlu0 %v682
    %v732 = vpop.xlane.xlu0 %731
    %733 = vadd.xlane.f32.xlu0 %v683
    %v734 = vpop.xlane.xlu0 %733
    %735 = vadd.xlane.f32.xlu0 %v684
    %v736 = vpop.xlane.xlu0 %735
    %737 = vadd.xlane.f32.xlu0 %v685
    %v738 = vpop.xlane.xlu0 %737
    %739 = vadd.xlane.f32.xlu0 %v686
    %v740 = vpop.xlane.xlu0 %739
    %741 = vadd.xlane.f32.xlu0 %v687
    %v742 = vpop.xlane.xlu0 %741
    %743 = vadd.xlane.f32.xlu0 %v688
    %v744 = vpop.xlane.xlu0 %743
    %745 = vadd.xlane.f32.xlu0 %v689
    %v746 = vpop.xlane.xlu0 %745
    %747 = vadd.xlane.f32.xlu0 %v690
    %v748 = vpop.xlane.xlu0 %747
    %749 = vadd.xlane.f32.xlu0 %v691
    %v750 = vpop.xlane.xlu0 %749
    %751 = vadd.xlane.f32.xlu0 %v692
    %v752 = vpop.xlane.xlu0 %751
    %753 = vadd.xlane.f32.xlu0 %v693
    %v754 = vpop.xlane.xlu0 %753
    %755 = vadd.xlane.f32.xlu0 %v694
    %v756 = vpop.xlane.xlu0 %755
    %757 = vadd.xlane.f32.xlu0 %v695
    %v758 = vpop.xlane.xlu0 %757
    %759 = vadd.xlane.f32.xlu0 %v696
    %v760 = vpop.xlane.xlu0 %759
    %v761 = vld [vmem:[#allocation10] sm:$0xff]
    %v762 = vld [vmem:[#allocation10 + $0x8] sm:$0xff]
    %v763 = vld [vmem:[#allocation10 + $0x10] sm:$0xff]
    %v764 = vld [vmem:[#allocation10 + $0x18] sm:$0xff]
    %v797 = vlaneseq
    %v798 = vand.u32 %v797, 127
    %v799 = vlaneseq
    %v800 = vshrl.u32 %v799, 7
    %v801 = vsub.s32 %v798, %v800
    %v802 = vrot.slane %v698, %v801
    %v803 = vadd.s32 %v798, 4294967288
    %v804 = vlaneseq
    %v805 = vshrl.u32 %v804, 7
    %v806 = vsub.s32 %v803, %v805
    %v807 = vrot.slane %v700, %v806
    %vm808 = vcmask 130112
    %v809 = vsel %vm808, %v807, %v802
    %v810 = vadd.s32 %v798, 4294967280
    %v811 = vlaneseq
    %v812 = vshrl.u32 %v811, 7
    %v813 = vsub.s32 %v810, %v812
    %v814 = vrot.slane %v702, %v813
    %vm815 = vcmask 195712
    %v816 = vsel %vm815, %v814, %v809
    %v817 = vadd.s32 %v798, 4294967272
    %v818 = vlaneseq
    %v819 = vshrl.u32 %v818, 7
    %v820 = vsub.s32 %v817, %v819
    %v821 = vrot.slane %v704, %v820
    %vm822 = vcmask 261312
    %v823 = vsel %vm822, %v821, %v816
    %v824 = vlaneseq
    %v825 = vshrl.u32 %v824, 7
    %v826 = vsub.s32 %v798, %v825
    %v827 = vrot.slane %v706, %v826
    %v828 = vlaneseq
    %v829 = vshrl.u32 %v828, 7
    %v830 = vsub.s32 %v803, %v829
    %v831 = vrot.slane %v708, %v830
    %v832 = vsel %vm808, %v831, %v827
    %v833 = vlaneseq
    %v834 = vshrl.u32 %v833, 7
    %v835 = vsub.s32 %v810, %v834
    %v836 = vrot.slane %v710, %v835
    %v837 = vsel %vm815, %v836, %v832
    %v838 = vlaneseq
    %v839 = vshrl.u32 %v838, 7
    %v840 = vsub.s32 %v817, %v839
    %v841 = vrot.slane %v712, %v840
    %v842 = vsel %vm822, %v841, %v837
    %v843 = vlaneseq
    %v844 = vshrl.u32 %v843, 7
    %v845 = vsub.s32 %v798, %v844
    %v846 = vrot.slane %v714, %v845
    %v847 = vlaneseq
    %v848 = vshrl.u32 %v847, 7
    %v849 = vsub.s32 %v803, %v848
    %v850 = vrot.slane %v716, %v849
    %v851 = vsel %vm808, %v850, %v846
    %v852 = vlaneseq
    %v853 = vshrl.u32 %v852, 7
    %v854 = vsub.s32 %v810, %v853
    %v855 = vrot.slane %v718, %v854
    %v856 = vsel %vm815, %v855, %v851
    %v857 = vlaneseq
    %v858 = vshrl.u32 %v857, 7
    %v859 = vsub.s32 %v817, %v858
    %v860 = vrot.slane %v720, %v859
    %v861 = vsel %vm822, %v860, %v856
    %v862 = vlaneseq
    %v863 = vshrl.u32 %v862, 7
    %v864 = vsub.s32 %v798, %v863
    %v865 = vrot.slane %v722, %v864
    %v866 = vlaneseq
    %v867 = vshrl.u32 %v866, 7
    %v868 = vsub.s32 %v803, %v867
    %v869 = vrot.slane %v724, %v868
    %v870 = vsel %vm808, %v869, %v865
    %v871 = vlaneseq
    %v872 = vshrl.u32 %v871, 7
    %v873 = vsub.s32 %v810, %v872
    %v874 = vrot.slane %v726, %v873
    %v875 = vsel %vm815, %v874, %v870
    %v876 = vlaneseq
    %v877 = vshrl.u32 %v876, 7
    %v878 = vsub.s32 %v817, %v877
    %v879 = vrot.slane %v728, %v878
    %v880 = vsel %vm822, %v879, %v875
    %v881 = vlaneseq
    %v882 = vshrl.u32 %v881, 7
    %v883 = vsub.s32 %v798, %v882
    %v884 = vrot.slane %v730, %v883
    %v885 = vlaneseq
    %v886 = vshrl.u32 %v885, 7
    %v887 = vsub.s32 %v803, %v886
    %v888 = vrot.slane %v732, %v887
    %v889 = vsel %vm808, %v888, %v884
    %v890 = vlaneseq
    %v891 = vshrl.u32 %v890, 7
    %v892 = vsub.s32 %v810, %v891
    %v893 = vrot.slane %v734, %v892
    %v894 = vsel %vm815, %v893, %v889
    %v895 = vlaneseq
    %v896 = vshrl.u32 %v895, 7
    %v897 = vsub.s32 %v817, %v896
    %v898 = vrot.slane %v736, %v897
    %v899 = vsel %vm822, %v898, %v894
    %v900 = vlaneseq
    %v901 = vshrl.u32 %v900, 7
    %v902 = vsub.s32 %v798, %v901
    %v903 = vrot.slane %v738, %v902
    %v904 = vlaneseq
    %v905 = vshrl.u32 %v904, 7
    %v906 = vsub.s32 %v803, %v905
    %v907 = vrot.slane %v740, %v906
    %v908 = vsel %vm808, %v907, %v903
    %v909 = vlaneseq
    %v910 = vshrl.u32 %v909, 7
    %v911 = vsub.s32 %v810, %v910
    %v912 = vrot.slane %v742, %v911
    %v913 = vsel %vm815, %v912, %v908
    %v914 = vlaneseq
    %v915 = vshrl.u32 %v914, 7
    %v916 = vsub.s32 %v817, %v915
    %v917 = vrot.slane %v744, %v916
    %v918 = vsel %vm822, %v917, %v913
    %v919 = vlaneseq
    %v920 = vshrl.u32 %v919, 7
    %v921 = vsub.s32 %v798, %v920
    %v922 = vrot.slane %v746, %v921
    %v923 = vlaneseq
    %v924 = vshrl.u32 %v923, 7
    %v925 = vsub.s32 %v803, %v924
    %v926 = vrot.slane %v748, %v925
    %v927 = vsel %vm808, %v926, %v922
    %v928 = vlaneseq
    %v929 = vshrl.u32 %v928, 7
    %v930 = vsub.s32 %v810, %v929
    %v931 = vrot.slane %v750, %v930
    %v932 = vsel %vm815, %v931, %v927
    %v933 = vlaneseq
    %v934 = vshrl.u32 %v933, 7
    %v935 = vsub.s32 %v817, %v934
    %v936 = vrot.slane %v752, %v935
    %v937 = vsel %vm822, %v936, %v932
    %v938 = vlaneseq
    %v939 = vshrl.u32 %v938, 7
    %v940 = vsub.s32 %v798, %v939
    %v941 = vrot.slane %v754, %v940
    %v942 = vlaneseq
    %v943 = vshrl.u32 %v942, 7
    %v944 = vsub.s32 %v803, %v943
    %v945 = vrot.slane %v756, %v944
    %v946 = vsel %vm808, %v945, %v941
    %v947 = vlaneseq
    %v948 = vshrl.u32 %v947, 7
    %v949 = vsub.s32 %v810, %v948
    %v950 = vrot.slane %v758, %v949
    %v951 = vsel %vm815, %v950, %v946
    %v952 = vlaneseq
    %v953 = vshrl.u32 %v952, 7
    %v954 = vsub.s32 %v817, %v953
    %v955 = vrot.slane %v760, %v954
    %v956 = vsel %vm822, %v955, %v951
    %v957 = vsel %vm489, %v842, %v823
    %v958 = vsel %vm492, %v861, %v957
    %v959 = vsel %vm495, %v880, %v958
    %v960 = vsel %vm498, %v899, %v959
    %v961 = vsel %vm501, %v918, %v960
    %v962 = vsel %vm504, %v937, %v961
    %v963 = vsel %vm507, %v956, %v962
    %965 = vrot.lane.b32.xlu0 %v197, 96
    %v966 = vpop.permute.xlu0 %965
    %v968 = vsel %vm126, %v963, 0
    %970 = vmatprep.subr.mxu0 0.0
    %971 = vmatpush1.msra.mxu0 %v761
    %972 = vmatprep.subr.mxu0 0.0
    %973 = vmatpush1.msra.mxu0 %v762
    %974 = vmatprep.subr.mxu0 0.0
    %975 = vmatpush1.msra.mxu0 %v763
    %976 = vmatprep.subr.mxu0 0.0
    %977 = vmatpush1.msra.mxu0 %v764
    %978 = vmatprep.subr.mxu0 0.0
    %979 = vmatpush1.msra.mxu0 0.0
    %980 = vmatprep.subr.mxu0 0.0
    %981 = vmatpush1.msra.mxu0 0.0
    %982 = vmatprep.subr.mxu0 0.0
    %983 = vmatpush1.msra.mxu0 0.0
    %984 = vmatprep.subr.mxu0 0.0
    %985 = vmatpush1.msra.mxu0 0.0
    %986 = vmatprep.subr.mxu0 0.0
    %987 = vmatpush1.msra.mxu0 0.0
    %988 = vmatprep.subr.mxu0 0.0
    %989 = vmatpush1.msra.mxu0 0.0
    %990 = vmatprep.subr.mxu0 0.0
    %991 = vmatpush1.msra.mxu0 0.0
    %992 = vmatprep.subr.mxu0 0.0
    %993 = vmatpush1.msra.mxu0 0.0
    %994 = vmatprep.subr.mxu0 0.0
    %995 = vmatpush1.msra.mxu0 0.0
    %996 = vmatprep.subr.mxu0 0.0
    %997 = vmatpush1.msra.mxu0 0.0
    %998 = vmatprep.subr.mxu0 0.0
    %999 = vmatpush1.msra.mxu0 0.0
    %1000 = vmatprep.subr.mxu0 0.0
    %1001 = vmatpush1.msra.mxu0 0.0
    %1002 = vmatprep.subr.mxu0 0.0
    %1003 = vmatpush1.msra.mxu0 0.0
    %1004 = vmatprep.subr.mxu0 0.0
    %1005 = vmatpush1.msra.mxu0 0.0
    %1006 = vmatprep.subr.mxu0 0.0
    %1007 = vmatpush1.msra.mxu0 0.0
    %1008 = vmatprep.subr.mxu0 0.0
    %1009 = vmatpush1.msra.mxu0 0.0
    %1010 = vmatprep.subr.mxu0 0.0
    %1011 = vmatpush1.msra.mxu0 0.0
    %1012 = vmatprep.subr.mxu0 0.0
    %1013 = vmatpush1.msra.mxu0 0.0
    %1014 = vmatprep.subr.mxu0 0.0
    %1015 = vmatpush1.msra.mxu0 0.0
    %1016 = vmatprep.subr.mxu0 0.0
    %1017 = vmatpush1.msra.mxu0 0.0
    %1018 = vmatprep.subr.mxu0 0.0
    %1019 = vmatpush1.msra.mxu0 0.0
    %1020 = vmatprep.subr.mxu0 0.0
    %1021 = vmatpush1.msra.mxu0 0.0
    %1022 = vmatprep.subr.mxu0 0.0
    %1023 = vmatpush1.msra.mxu0 0.0
    %1024 = vmatprep.subr.mxu0 0.0
    %1025 = vmatpush1.msra.mxu0 0.0
    %1026 = vmatprep.subr.mxu0 0.0
    %1027 = vmatpush1.msra.mxu0 0.0
    %1028 = vmatprep.subr.mxu0 0.0
    %1029 = vmatpush1.msra.mxu0 0.0
    %1030 = vmatprep.subr.mxu0 0.0
    %1031 = vmatpush1.msra.mxu0 0.0
    %1032 = vmatprep.subr.mxu0 0.0
    %1033 = vmatpush1.msra.mxu0 0.0
    %1034 = vmatprep.mubr.f32.mxu0 0.0
    %1035 = vmatmul.mubr.f32.gmra.mrb[0].mxu0 %v968
    %v1036 = vpop.f32.mrb[0].mxu0
    %v1037 = vadd.f32 %v966, %v1036
    %v1038 = vpop.f32.mrb[0].mxu0
    %1039 = vdwg.mxu0
    %v1040 = vtanh.pop %v1037
    %1041 = vst.msk [vmem:[#allocation11] sm:$0xff] %vm126, %v1040
    // Predicated region
    $region42: #{attention_step.1} parent=1 // pred_check
      _
    $region43: #{attention_step.1} parent=1 // pred_check_branch
      %1043 = sbr.rel (0) target = $region45
    $region44: #{attention_step.1} parent=1 // pred_region
      %s1045 = ssub.s32 128, 128
      %1046 = vsyncadd [#allocation4], %s1045
      %s1048 = sshll.u32 [#allocation11], 4
      %s1049 = int_to_ptr.vmem [resolvable:$true] %s1048
      %1051 = dma.vmem_to_hbm [thread:$0]  %s1049, 128, %s5, [#allocation4]
    $region45: #{attention_step.1} parent=1 // pred_fallthru
      _
    // Predicated region
    $region46: #{attention_step.1} parent=1 // pred_check
      _
    $region47: #{attention_step.1} parent=1 // pred_check_branch
      %1053 = sbr.rel (0) target = $region49
    $region48: #{attention_step.1} parent=1 // pred_region
      %s1055 = ssub.s32 128, 128
      %1056 = vsyncadd [#allocation13], %s1055
      %s1058 = sshll.u32 [#allocation12], 4
      %s1059 = int_to_ptr.vmem [resolvable:$true] %s1058
      %1061 = dma.vmem_to_hbm [thread:$0]  %s1059, 128, %s6, [#allocation13]
    $region49: #{attention_step.1} parent=1 // pred_fallthru
      _
    // Predicated region
    $region50: #{attention_step.1} parent=1 // pred_check
      _
    $region51: #{attention_step.1} parent=1 // pred_check_branch
      %1063 = sbr.rel (0) target = $region53
    $region52: #{attention_step.1} parent=1 // pred_region
      %1064 = dma.done [#allocation4], 128
    $region53: #{attention_step.1} parent=1 // pred_fallthru
      _
    // Predicated region
    $region54: #{attention_step.1} parent=1 // pred_check
      _
    $region55: #{attention_step.1} parent=1 // pred_check_branch
      %1066 = sbr.rel (0) target = $region57
    $region56: #{attention_step.1} parent=1 // pred_region
      %1067 = dma.done [#allocation13], 128
    $region57: #{attention_step.1} parent=1 // pred_fallthru
      _
    %1068 = vsyncpa [#allocation3], 1
    %1069 = vsyncpa [#allocation6], 1
    %1070 = vsyncpa [#allocation9], 1
    %1071 = vsyncpa [#allocation4], 1
    %1072 = vsyncpa [#allocation13], 1

</llo_original>
